<compile_context>
chip_gen: v6e
topology: v6e:2x2x1
jax: 0.10.0
libtpu: 0.0.40
codegen_flags: <defaults>
</compile_context>

<pallas_src>
import jax
import jax.numpy as jnp
import numpy as np
from jax import lax
from jax.experimental import pallas as pl
from jax.experimental.pallas import tpu as pltpu  # noqa: F401  (TPU backend assumed)

KH = KW = 5
POOL = 2
CIN = 3
COUT = 16
HIDDEN = 64
CLASS_NUM = 6
BN_EPS = 1e-5
# Linear(480, 64) forces pooled spatial = 5 x 6  ->  input spatial = 14 x 16.
H_IN, W_IN = 14, 16
PH, PW = (H_IN - KH + 1) // POOL, (W_IN - KW + 1) // POOL    # 5, 6
S = PH * PW                                                  # 30 pooled positions per sample
S_PAD = 32                                                   # padded rows per sample (8-aligned)
K_SUP = CIN * 2 * 2 * 3 * 3                                  # 108 superpatch features
K_PAD = 128                                                  # contraction dim, lane aligned
# layout of the coalesced constant table (rows x 64 lanes, f32)
TAB_W2 = COUT * S_PAD            # 512 : rows 0..511  = Linear(480,64) weight, flatten-order folded
TAB_B1 = TAB_W2 + HIDDEN         # 576 : rows 512..575 = W2^T (lanes >= CLASS_NUM are zero)
TAB_B2 = TAB_B1 + 8              # 584 : row 576 = b1 ; row 584 = b2 (8-row aligned slices)
TAB_ROWS = TAB_B2 + 8            # 592


# ---------------------------------------------------------------------------
# Single fused Pallas kernel
# ---------------------------------------------------------------------------
def _mynet_kernel(p_ref, wsp_ref, tab_ref, o_ref):
    """Whole MyNet forward.

    p_ref   : (B*S_PAD, K_PAD) bf16  superpatch rows ordered (n, ph, pw); col K_SUP==1 on valid rows
    wsp_ref : (K_PAD, 4*COUT)  bf16  conv weight, BN + bias folded, 4 pooling offsets in lanes
    tab_ref : (TAB_ROWS, HIDDEN) f32 [W1 per-channel 32-row blocks | W2^T | b1 | b2]
    o_ref   : (B, CLASS_NUM)   f32   softmax probabilities
    """
    batch = o_ref.shape[0]

    # conv + folded-BN + bias + 2x2 maxpool (4 offsets in the 64 output lanes) + ReLU:
    # one bf16 MXU matmul, a lane-group max, one ReLU.
    ycat = jnp.dot(p_ref[...], wsp_ref[...], preferred_element_type=jnp.float32)   # (B*32, 64)
    y = jnp.maximum(
        jnp.maximum(ycat[:, 0 * COUT:1 * COUT], ycat[:, 1 * COUT:2 * COUT]),
        jnp.maximum(ycat[:, 2 * COUT:3 * COUT], ycat[:, 3 * COUT:4 * COUT]),
    )
    y = jnp.maximum(y, 0.0)                               # (B*32, 16); padded rows are exactly 0
    y3 = y.reshape(batch, S_PAD, COUT)                    # leading-dim split only (32 % 8 == 0)

    # Linear(480, 64): PyTorch flatten order (co, ph, pw) is folded into the table rows.
    # 4 independent partial accumulators break the 16-deep serial VALU dependency chain;
    # zero table rows (s = 30, 31 per channel) absorb the padded rows.
    accs = [y3[:, :, co:co + 1] * tab_ref[co * S_PAD:(co + 1) * S_PAD, :] for co in range(4)]
    for co in range(4, COUT):
        accs[co % 4] = accs[co % 4] + y3[:, :, co:co + 1] * tab_ref[co * S_PAD:(co + 1) * S_PAD, :]
    t = (accs[0] + accs[1]) + (accs[2] + accs[3])         # (B, 32, 64)
    h = jnp.sum(t, axis=1) + tab_ref[TAB_B1:TAB_B1 + 1, :]  # one sublane reduce + bias
    h = jnp.maximum(h, 0.0)                               # (B, 64)

    # Linear(64, class_num) + Softmax(dim=1)
    w2t = tab_ref[TAB_W2:TAB_W2 + HIDDEN, :]              # (64, 64); lanes >= CLASS_NUM are zero
    logits = (jnp.dot(h, w2t, preferred_element_type=jnp.float32)
              + tab_ref[TAB_B2:TAB_B2 + 1, :])[:, :CLASS_NUM]
    mx = jnp.max(logits, axis=-1, keepdims=True)
    e = jnp.exp(logits - mx)
    o_ref[...] = e * pl.reciprocal(jnp.sum(e, axis=-1, keepdims=True), approx=True)


# ---------------------------------------------------------------------------
# Wrapper glue: cheap superpatch im2col (9 unit-stride slices on a ~5 KB bf16 tensor)
# ---------------------------------------------------------------------------
def _build_patches(x_nchw):
    """(N,3,14,16) NCHW f32 -> (N*S_PAD, K_PAD) bf16, rows ordered (n, ph, pw).
    Feature k = ((ci*2+a)*2+b)*9 + u*3 + v holds x[n, ci, 2*(ph+u)+a, 2*(pw+v)+b];
    column K_SUP is 1.0 on the 30 valid rows (conv/BN bias rides the matmul); padding is 0."""
    n = x_nchw.shape[0]
    x = x_nchw.astype(jnp.bfloat16)                              # cast first: half the relayout bytes
    xq = x.reshape(n, CIN, H_IN // 2, 2, W_IN // 2, 2)           # [n, ci, i, a, j, b]
    xq = xq.transpose(0, 2, 4, 1, 3, 5)                          # [n, i, j, ci, a, b]
    wins = [xq[:, u:u + PH, v:v + PW] for u in range(3) for v in range(3)]
    p = jnp.stack(wins, axis=-1).reshape(n, S, K_SUP)            # rows (ph,pw), cols (ci,a,b,u,v)
    p = jnp.concatenate(
        [p, jnp.ones((n, S, 1), jnp.bfloat16),
         jnp.zeros((n, S, K_PAD - K_SUP - 1), jnp.bfloat16)], axis=-1)   # (n, 30, 128)
    p = jnp.pad(p, ((0, 0), (0, S_PAD - S), (0, 0)))             # padded rows are all-zero
    return p.reshape(n * S_PAD, K_PAD)


# ---------------------------------------------------------------------------
# One-time, batch-independent parameter folding (host side)
# ---------------------------------------------------------------------------
def prepare_params(params):
    scale = np.asarray(params["bn_gamma"]) / np.sqrt(np.asarray(params["bn_var"]) + BN_EPS)
    wf = np.asarray(params["conv_w"]) * scale[:, None, None, None]            # (16,3,5,5)
    bconv = (np.asarray(params["conv_b"]) - np.asarray(params["bn_mean"])) * scale \
        + np.asarray(params["bn_beta"])                                       # (16,)

    # Superpatch conv weight: column d*COUT+co is the conv at pooling offset d=(dh,dw).
    wsp = np.zeros((K_PAD, 4 * COUT), np.float32)
    for ci in range(CIN):
        for a in range(2):
            for b in range(2):
                for u in range(3):
                    for v in range(3):
                        k = ((ci * 2 + a) * 2 + b) * 9 + u * 3 + v
                        for dh in range(POOL):
                            for dw in range(POOL):
                                kh, kw = 2 * u + a - dh, 2 * v + b - dw
                                if 0 <= kh < KH and 0 <= kw < KW:
                                    d = dh * POOL + dw
                                    wsp[k, d * COUT:(d + 1) * COUT] = wf[:, ci, kh, kw]
    # Fold conv/BN bias: patches[:, K_SUP] == 1.0 on valid rows, and
    # max_d(x_d + b) == max_d(x_d) + b for a per-channel constant.
    for d in range(4):
        wsp[K_SUP, d * COUT:(d + 1) * COUT] = bconv

    # Coalesced constant table: W1 (flatten order (co, ph, pw) folded, zero pad rows), W2^T, b1, b2.
    tab = np.zeros((TAB_ROWS, HIDDEN), np.float32)
    w1 = np.asarray(params["w1"]).reshape(HIDDEN, COUT, S).transpose(1, 2, 0)  # (16, 30, 64)
    for co in range(COUT):
        tab[co * S_PAD: co * S_PAD + S, :] = w1[co]
    tab[TAB_W2:TAB_W2 + HIDDEN, :CLASS_NUM] = np.asarray(params["w2"]).T       # (64, 6)
    tab[TAB_B1, :] = np.asarray(params["b1"])
    tab[TAB_B2, :CLASS_NUM] = np.asarray(params["b2"])

    return {"wsp": jnp.asarray(wsp, jnp.bfloat16), "tab": jnp.asarray(tab, jnp.float32)}


# ---------------------------------------------------------------------------
# Forward pass (Pallas) and pure-JAX reference
# ---------------------------------------------------------------------------
@jax.jit
def mynet_forward(x_nchw, prep):
    batch = x_nchw.shape[0]
    patches = _build_patches(x_nchw)
    # NOTE: if batch grows large, add a 1-D grid over sample blocks
    # (patches BlockSpec (TM*S_PAD, K_PAD), out (TM, CLASS_NUM), weights full) with
    # dimension_semantics=("parallel",) to bound VMEM and shard across v7x's 2 TensorCores.
    # At batch=2 a single invocation is optimal.
    return pl.pallas_call(
        _mynet_kernel,
        out_shape=jax.ShapeDtypeStruct((batch, CLASS_NUM), jnp.float32),
    )(patches, prep["wsp"], prep["tab"])


def init_params(key):
    ks = jax.random.split(key, 10)
    flat_dim = COUT * PH * PW  # 480, matches nn.Linear(480, 64)
    return {
        "conv_w": 0.10 * jax.random.normal(ks[0], (COUT, CIN, KH, KW), jnp.float32),
        "conv_b": 0.10 * jax.random.normal(ks[1], (COUT,), jnp.float32),
        "bn_gamma": 1.0 + 0.10 * jax.random.normal(ks[2], (COUT,), jnp.float32),
        "bn_beta": 0.10 * jax.random.normal(ks[3], (COUT,), jnp.float32),
        "bn_mean": 0.10 * jax.random.normal(ks[4], (COUT,), jnp.float32),
        "bn_var": 1.0 + 0.5 * jnp.abs(jax.random.normal(ks[5], (COUT,), jnp.float32)),
        "w1": 0.05 * jax.random.normal(ks[6], (HIDDEN, flat_dim), jnp.float32),
        "b1": 0.05 * jax.random.normal(ks[7], (HIDDEN,), jnp.float32),
        "w2": 0.05 * jax.random.normal(ks[8], (CLASS_NUM, HIDDEN), jnp.float32),
        "b2": 0.05 * jax.random.normal(ks[9], (CLASS_NUM,), jnp.float32),
    }


def reference_forward(x, p):
    conv = lax.conv_general_dilated(
        x, p["conv_w"], window_strides=(1, 1), padding="VALID",
        dimension_numbers=("NCHW", "OIHW", "NCHW"),
    ) + p["conv_b"][None, :, None, None]
    scale = (p["bn_gamma"] / jnp.sqrt(p["bn_var"] + BN_EPS))[None, :, None, None]
    bn = (conv - p["bn_mean"][None, :, None, None]) * scale + p["bn_beta"][None, :, None, None]
    r = jnp.maximum(bn, 0.0)
    pooled = lax.reduce_window(r, -jnp.inf, lax.max,
                               (1, 1, POOL, POOL), (1, 1, POOL, POOL), "VALID")
    flat = pooled.reshape(x.shape[0], -1)
    h = jnp.maximum(flat @ p["w1"].T + p["b1"][None, :], 0.0)
    logits = h @ p["w2"].T + p["b2"][None, :]
    return jax.nn.softmax(logits, axis=1)


if __name__ == "__main__":
    key = jax.random.PRNGKey(0)
    pkey, xkey = jax.random.split(key)
    params = init_params(pkey)
    x = jax.random.normal(xkey, (2, CIN, H_IN, W_IN), jnp.float32)   # NCHW, like PyTorch

    prep = prepare_params(params)                      # batch-independent folding
    out = jax.block_until_ready(mynet_forward(x, prep))
    ref = jax.block_until_ready(reference_forward(x, params))

    assert out.shape == (2, CLASS_NUM), out.shape
    np.testing.assert_allclose(np.asarray(out), np.asarray(ref), atol=1e-2, rtol=1e-2)
    print("KERNEL_OK")
</pallas_src>

<mosaic_0001>
module attributes {stable_mosaic.version = 11 : i64} {
  func.func @_mynet_kernel(%arg0: memref<64x128xbf16, #tpu.memory_space<vmem>>, %arg1: memref<128x64xbf16, #tpu.memory_space<vmem>>, %arg2: memref<592x64xf32, #tpu.memory_space<vmem>>, %arg3: memref<2x6xf32, #tpu.memory_space<vmem>>) attributes {dimension_semantics = [], scalar_prefetch = 0 : i64, scratch_operands = 0 : i64, tpu.core_type = #tpu.core_type<tc>} {
    %c0 = arith.constant 0 : index
    %c0_0 = arith.constant 0 : index
    %0 = vector.load %arg0[%c0, %c0_0] : memref<64x128xbf16, #tpu.memory_space<vmem>>, vector<64x128xbf16>
    %c0_1 = arith.constant 0 : index
    %c0_2 = arith.constant 0 : index
    %1 = vector.load %arg1[%c0_1, %c0_2] : memref<128x64xbf16, #tpu.memory_space<vmem>>, vector<128x64xbf16>
    %cst = arith.constant dense<0.000000e+00> : vector<64x64xf32>
    %2 = tpu.matmul %0, %1, %cst {dimension_numbers = #tpu.dot_dimension_numbers<[1], [0], [0], [1], [0, 0, 1, 1], [], []>} : vector<64x128xbf16>, vector<128x64xbf16>, vector<64x64xf32> -> vector<64x64xf32>
    %3 = vector.extract_strided_slice %2 {offsets = [0, 0], sizes = [64, 16], strides = [1, 1]} : vector<64x64xf32> to vector<64x16xf32>
    %4 = vector.extract_strided_slice %2 {offsets = [0, 16], sizes = [64, 16], strides = [1, 1]} : vector<64x64xf32> to vector<64x16xf32>
    %5 = arith.maximumf %3, %4 : vector<64x16xf32>
    %6 = vector.extract_strided_slice %2 {offsets = [0, 32], sizes = [64, 16], strides = [1, 1]} : vector<64x64xf32> to vector<64x16xf32>
    %7 = vector.extract_strided_slice %2 {offsets = [0, 48], sizes = [64, 16], strides = [1, 1]} : vector<64x64xf32> to vector<64x16xf32>
    %8 = arith.maximumf %6, %7 : vector<64x16xf32>
    %9 = arith.maximumf %5, %8 : vector<64x16xf32>
    %cst_3 = arith.constant 0.000000e+00 : f32
    %10 = vector.broadcast %cst_3 : f32 to vector<64x16xf32>
    %11 = arith.maximumf %9, %10 : vector<64x16xf32>
    %12 = vector.shape_cast %11 : vector<64x16xf32> to vector<2x32x16xf32>
    %13 = vector.extract_strided_slice %12 {offsets = [0, 0, 0], sizes = [2, 32, 1], strides = [1, 1, 1]} : vector<2x32x16xf32> to vector<2x32x1xf32>
    %c0_4 = arith.constant 0 : index
    %c0_5 = arith.constant 0 : index
    %14 = vector.load %arg2[%c0_4, %c0_5] : memref<592x64xf32, #tpu.memory_space<vmem>>, vector<32x64xf32>
    %15 = vector.shape_cast %14 : vector<32x64xf32> to vector<1x32x64xf32>
    %16 = vector.broadcast %13 : vector<2x32x1xf32> to vector<2x32x64xf32>
    %17 = vector.broadcast %15 : vector<1x32x64xf32> to vector<2x32x64xf32>
    %18 = arith.mulf %16, %17 : vector<2x32x64xf32>
    %19 = vector.extract_strided_slice %12 {offsets = [0, 0, 1], sizes = [2, 32, 1], strides = [1, 1, 1]} : vector<2x32x16xf32> to vector<2x32x1xf32>
    %c32 = arith.constant 32 : index
    %c0_6 = arith.constant 0 : index
    %20 = vector.load %arg2[%c32, %c0_6] : memref<592x64xf32, #tpu.memory_space<vmem>>, vector<32x64xf32>
    %21 = vector.shape_cast %20 : vector<32x64xf32> to vector<1x32x64xf32>
    %22 = vector.broadcast %19 : vector<2x32x1xf32> to vector<2x32x64xf32>
    %23 = vector.broadcast %21 : vector<1x32x64xf32> to vector<2x32x64xf32>
    %24 = arith.mulf %22, %23 : vector<2x32x64xf32>
    %25 = vector.extract_strided_slice %12 {offsets = [0, 0, 2], sizes = [2, 32, 1], strides = [1, 1, 1]} : vector<2x32x16xf32> to vector<2x32x1xf32>
    %c64 = arith.constant 64 : index
    %c0_7 = arith.constant 0 : index
    %26 = vector.load %arg2[%c64, %c0_7] : memref<592x64xf32, #tpu.memory_space<vmem>>, vector<32x64xf32>
    %27 = vector.shape_cast %26 : vector<32x64xf32> to vector<1x32x64xf32>
    %28 = vector.broadcast %25 : vector<2x32x1xf32> to vector<2x32x64xf32>
    %29 = vector.broadcast %27 : vector<1x32x64xf32> to vector<2x32x64xf32>
    %30 = arith.mulf %28, %29 : vector<2x32x64xf32>
    %31 = vector.extract_strided_slice %12 {offsets = [0, 0, 3], sizes = [2, 32, 1], strides = [1, 1, 1]} : vector<2x32x16xf32> to vector<2x32x1xf32>
    %c96 = arith.constant 96 : index
    %c0_8 = arith.constant 0 : index
    %32 = vector.load %arg2[%c96, %c0_8] : memref<592x64xf32, #tpu.memory_space<vmem>>, vector<32x64xf32>
    %33 = vector.shape_cast %32 : vector<32x64xf32> to vector<1x32x64xf32>
    %34 = vector.broadcast %31 : vector<2x32x1xf32> to vector<2x32x64xf32>
    %35 = vector.broadcast %33 : vector<1x32x64xf32> to vector<2x32x64xf32>
    %36 = arith.mulf %34, %35 : vector<2x32x64xf32>
    %37 = vector.extract_strided_slice %12 {offsets = [0, 0, 4], sizes = [2, 32, 1], strides = [1, 1, 1]} : vector<2x32x16xf32> to vector<2x32x1xf32>
    %c128 = arith.constant 128 : index
    %c0_9 = arith.constant 0 : index
    %38 = vector.load %arg2[%c128, %c0_9] : memref<592x64xf32, #tpu.memory_space<vmem>>, vector<32x64xf32>
    %39 = vector.shape_cast %38 : vector<32x64xf32> to vector<1x32x64xf32>
    %40 = vector.broadcast %37 : vector<2x32x1xf32> to vector<2x32x64xf32>
    %41 = vector.broadcast %39 : vector<1x32x64xf32> to vector<2x32x64xf32>
    %42 = arith.mulf %40, %41 : vector<2x32x64xf32>
    %43 = arith.addf %18, %42 : vector<2x32x64xf32>
    %44 = vector.extract_strided_slice %12 {offsets = [0, 0, 5], sizes = [2, 32, 1], strides = [1, 1, 1]} : vector<2x32x16xf32> to vector<2x32x1xf32>
    %c160 = arith.constant 160 : index
    %c0_10 = arith.constant 0 : index
    %45 = vector.load %arg2[%c160, %c0_10] : memref<592x64xf32, #tpu.memory_space<vmem>>, vector<32x64xf32>
    %46 = vector.shape_cast %45 : vector<32x64xf32> to vector<1x32x64xf32>
    %47 = vector.broadcast %44 : vector<2x32x1xf32> to vector<2x32x64xf32>
    %48 = vector.broadcast %46 : vector<1x32x64xf32> to vector<2x32x64xf32>
    %49 = arith.mulf %47, %48 : vector<2x32x64xf32>
    %50 = arith.addf %24, %49 : vector<2x32x64xf32>
    %51 = vector.extract_strided_slice %12 {offsets = [0, 0, 6], sizes = [2, 32, 1], strides = [1, 1, 1]} : vector<2x32x16xf32> to vector<2x32x1xf32>
    %c192 = arith.constant 192 : index
    %c0_11 = arith.constant 0 : index
    %52 = vector.load %arg2[%c192, %c0_11] : memref<592x64xf32, #tpu.memory_space<vmem>>, vector<32x64xf32>
    %53 = vector.shape_cast %52 : vector<32x64xf32> to vector<1x32x64xf32>
    %54 = vector.broadcast %51 : vector<2x32x1xf32> to vector<2x32x64xf32>
    %55 = vector.broadcast %53 : vector<1x32x64xf32> to vector<2x32x64xf32>
    %56 = arith.mulf %54, %55 : vector<2x32x64xf32>
    %57 = arith.addf %30, %56 : vector<2x32x64xf32>
    %58 = vector.extract_strided_slice %12 {offsets = [0, 0, 7], sizes = [2, 32, 1], strides = [1, 1, 1]} : vector<2x32x16xf32> to vector<2x32x1xf32>
    %c224 = arith.constant 224 : index
    %c0_12 = arith.constant 0 : index
    %59 = vector.load %arg2[%c224, %c0_12] : memref<592x64xf32, #tpu.memory_space<vmem>>, vector<32x64xf32>
    %60 = vector.shape_cast %59 : vector<32x64xf32> to vector<1x32x64xf32>
    %61 = vector.broadcast %58 : vector<2x32x1xf32> to vector<2x32x64xf32>
    %62 = vector.broadcast %60 : vector<1x32x64xf32> to vector<2x32x64xf32>
    %63 = arith.mulf %61, %62 : vector<2x32x64xf32>
    %64 = arith.addf %36, %63 : vector<2x32x64xf32>
    %65 = vector.extract_strided_slice %12 {offsets = [0, 0, 8], sizes = [2, 32, 1], strides = [1, 1, 1]} : vector<2x32x16xf32> to vector<2x32x1xf32>
    %c256 = arith.constant 256 : index
    %c0_13 = arith.constant 0 : index
    %66 = vector.load %arg2[%c256, %c0_13] : memref<592x64xf32, #tpu.memory_space<vmem>>, vector<32x64xf32>
    %67 = vector.shape_cast %66 : vector<32x64xf32> to vector<1x32x64xf32>
    %68 = vector.broadcast %65 : vector<2x32x1xf32> to vector<2x32x64xf32>
    %69 = vector.broadcast %67 : vector<1x32x64xf32> to vector<2x32x64xf32>
    %70 = arith.mulf %68, %69 : vector<2x32x64xf32>
    %71 = arith.addf %43, %70 : vector<2x32x64xf32>
    %72 = vector.extract_strided_slice %12 {offsets = [0, 0, 9], sizes = [2, 32, 1], strides = [1, 1, 1]} : vector<2x32x16xf32> to vector<2x32x1xf32>
    %c288 = arith.constant 288 : index
    %c0_14 = arith.constant 0 : index
    %73 = vector.load %arg2[%c288, %c0_14] : memref<592x64xf32, #tpu.memory_space<vmem>>, vector<32x64xf32>
    %74 = vector.shape_cast %73 : vector<32x64xf32> to vector<1x32x64xf32>
    %75 = vector.broadcast %72 : vector<2x32x1xf32> to vector<2x32x64xf32>
    %76 = vector.broadcast %74 : vector<1x32x64xf32> to vector<2x32x64xf32>
    %77 = arith.mulf %75, %76 : vector<2x32x64xf32>
    %78 = arith.addf %50, %77 : vector<2x32x64xf32>
    %79 = vector.extract_strided_slice %12 {offsets = [0, 0, 10], sizes = [2, 32, 1], strides = [1, 1, 1]} : vector<2x32x16xf32> to vector<2x32x1xf32>
    %c320 = arith.constant 320 : index
    %c0_15 = arith.constant 0 : index
    %80 = vector.load %arg2[%c320, %c0_15] : memref<592x64xf32, #tpu.memory_space<vmem>>, vector<32x64xf32>
    %81 = vector.shape_cast %80 : vector<32x64xf32> to vector<1x32x64xf32>
    %82 = vector.broadcast %79 : vector<2x32x1xf32> to vector<2x32x64xf32>
    %83 = vector.broadcast %81 : vector<1x32x64xf32> to vector<2x32x64xf32>
    %84 = arith.mulf %82, %83 : vector<2x32x64xf32>
    %85 = arith.addf %57, %84 : vector<2x32x64xf32>
    %86 = vector.extract_strided_slice %12 {offsets = [0, 0, 11], sizes = [2, 32, 1], strides = [1, 1, 1]} : vector<2x32x16xf32> to vector<2x32x1xf32>
    %c352 = arith.constant 352 : index
    %c0_16 = arith.constant 0 : index
    %87 = vector.load %arg2[%c352, %c0_16] : memref<592x64xf32, #tpu.memory_space<vmem>>, vector<32x64xf32>
    %88 = vector.shape_cast %87 : vector<32x64xf32> to vector<1x32x64xf32>
    %89 = vector.broadcast %86 : vector<2x32x1xf32> to vector<2x32x64xf32>
    %90 = vector.broadcast %88 : vector<1x32x64xf32> to vector<2x32x64xf32>
    %91 = arith.mulf %89, %90 : vector<2x32x64xf32>
    %92 = arith.addf %64, %91 : vector<2x32x64xf32>
    %93 = vector.extract_strided_slice %12 {offsets = [0, 0, 12], sizes = [2, 32, 1], strides = [1, 1, 1]} : vector<2x32x16xf32> to vector<2x32x1xf32>
    %c384 = arith.constant 384 : index
    %c0_17 = arith.constant 0 : index
    %94 = vector.load %arg2[%c384, %c0_17] : memref<592x64xf32, #tpu.memory_space<vmem>>, vector<32x64xf32>
    %95 = vector.shape_cast %94 : vector<32x64xf32> to vector<1x32x64xf32>
    %96 = vector.broadcast %93 : vector<2x32x1xf32> to vector<2x32x64xf32>
    %97 = vector.broadcast %95 : vector<1x32x64xf32> to vector<2x32x64xf32>
    %98 = arith.mulf %96, %97 : vector<2x32x64xf32>
    %99 = arith.addf %71, %98 : vector<2x32x64xf32>
    %100 = vector.extract_strided_slice %12 {offsets = [0, 0, 13], sizes = [2, 32, 1], strides = [1, 1, 1]} : vector<2x32x16xf32> to vector<2x32x1xf32>
    %c416 = arith.constant 416 : index
    %c0_18 = arith.constant 0 : index
    %101 = vector.load %arg2[%c416, %c0_18] : memref<592x64xf32, #tpu.memory_space<vmem>>, vector<32x64xf32>
    %102 = vector.shape_cast %101 : vector<32x64xf32> to vector<1x32x64xf32>
    %103 = vector.broadcast %100 : vector<2x32x1xf32> to vector<2x32x64xf32>
    %104 = vector.broadcast %102 : vector<1x32x64xf32> to vector<2x32x64xf32>
    %105 = arith.mulf %103, %104 : vector<2x32x64xf32>
    %106 = arith.addf %78, %105 : vector<2x32x64xf32>
    %107 = vector.extract_strided_slice %12 {offsets = [0, 0, 14], sizes = [2, 32, 1], strides = [1, 1, 1]} : vector<2x32x16xf32> to vector<2x32x1xf32>
    %c448 = arith.constant 448 : index
    %c0_19 = arith.constant 0 : index
    %108 = vector.load %arg2[%c448, %c0_19] : memref<592x64xf32, #tpu.memory_space<vmem>>, vector<32x64xf32>
    %109 = vector.shape_cast %108 : vector<32x64xf32> to vector<1x32x64xf32>
    %110 = vector.broadcast %107 : vector<2x32x1xf32> to vector<2x32x64xf32>
    %111 = vector.broadcast %109 : vector<1x32x64xf32> to vector<2x32x64xf32>
    %112 = arith.mulf %110, %111 : vector<2x32x64xf32>
    %113 = arith.addf %85, %112 : vector<2x32x64xf32>
    %114 = vector.extract_strided_slice %12 {offsets = [0, 0, 15], sizes = [2, 32, 1], strides = [1, 1, 1]} : vector<2x32x16xf32> to vector<2x32x1xf32>
    %c480 = arith.constant 480 : index
    %c0_20 = arith.constant 0 : index
    %115 = vector.load %arg2[%c480, %c0_20] : memref<592x64xf32, #tpu.memory_space<vmem>>, vector<32x64xf32>
    %116 = vector.shape_cast %115 : vector<32x64xf32> to vector<1x32x64xf32>
    %117 = vector.broadcast %114 : vector<2x32x1xf32> to vector<2x32x64xf32>
    %118 = vector.broadcast %116 : vector<1x32x64xf32> to vector<2x32x64xf32>
    %119 = arith.mulf %117, %118 : vector<2x32x64xf32>
    %120 = arith.addf %92, %119 : vector<2x32x64xf32>
    %121 = arith.addf %99, %106 : vector<2x32x64xf32>
    %122 = arith.addf %113, %120 : vector<2x32x64xf32>
    %123 = arith.addf %121, %122 : vector<2x32x64xf32>
    %cst_21 = arith.constant dense<0.000000e+00> : vector<2x64xf32>
    %124 = vector.multi_reduction <add>, %123, %cst_21 [1] : vector<2x32x64xf32> to vector<2x64xf32>
    %c576 = arith.constant 576 : index
    %c0_22 = arith.constant 0 : index
    %125 = vector.load %arg2[%c576, %c0_22] : memref<592x64xf32, #tpu.memory_space<vmem>>, vector<1x64xf32>
    %126 = vector.broadcast %125 : vector<1x64xf32> to vector<2x64xf32>
    %127 = arith.addf %124, %126 : vector<2x64xf32>
    %cst_23 = arith.constant 0.000000e+00 : f32
    %128 = vector.broadcast %cst_23 : f32 to vector<2x64xf32>
    %129 = arith.maximumf %127, %128 : vector<2x64xf32>
    %c512 = arith.constant 512 : index
    %c0_24 = arith.constant 0 : index
    %130 = vector.load %arg2[%c512, %c0_24] : memref<592x64xf32, #tpu.memory_space<vmem>>, vector<64x64xf32>
    %cst_25 = arith.constant dense<0.000000e+00> : vector<2x64xf32>
    %131 = tpu.matmul %129, %130, %cst_25 {dimension_numbers = #tpu.dot_dimension_numbers<[1], [0], [0], [1], [0, 0, 1, 1], [], []>} : vector<2x64xf32>, vector<64x64xf32>, vector<2x64xf32> -> vector<2x64xf32>
    %c584 = arith.constant 584 : index
    %c0_26 = arith.constant 0 : index
    %132 = vector.load %arg2[%c584, %c0_26] : memref<592x64xf32, #tpu.memory_space<vmem>>, vector<1x64xf32>
    %133 = vector.broadcast %132 : vector<1x64xf32> to vector<2x64xf32>
    %134 = arith.addf %131, %133 : vector<2x64xf32>
    %135 = vector.extract_strided_slice %134 {offsets = [0, 0], sizes = [2, 6], strides = [1, 1]} : vector<2x64xf32> to vector<2x6xf32>
    %cst_27 = arith.constant dense<0xFF800000> : vector<2xf32>
    %136 = vector.multi_reduction <maximumf>, %135, %cst_27 [1] : vector<2x6xf32> to vector<2xf32>
    %137 = vector.shape_cast %136 : vector<2xf32> to vector<2x1xf32>
    %138 = vector.broadcast %137 : vector<2x1xf32> to vector<2x6xf32>
    %139 = arith.subf %135, %138 : vector<2x6xf32>
    %140 = math.exp %139 : vector<2x6xf32>
    %cst_28 = arith.constant dense<0.000000e+00> : vector<2xf32>
    %141 = vector.multi_reduction <add>, %140, %cst_28 [1] : vector<2x6xf32> to vector<2xf32>
    %142 = vector.shape_cast %141 : vector<2xf32> to vector<2x1xf32>
    %143 = tpu.reciprocal %142 {approx = true} : vector<2x1xf32> -> vector<2x1xf32>
    %144 = vector.broadcast %143 : vector<2x1xf32> to vector<2x6xf32>
    %145 = arith.mulf %140, %144 : vector<2x6xf32>
    %c0_29 = arith.constant 0 : index
    %c0_30 = arith.constant 0 : index
    %146 = vector.load %arg3[%c0_29, %c0_30] : memref<2x6xf32, #tpu.memory_space<vmem>>, vector<2x6xf32>
    tpu.vector_store %arg3[%c0_29, %c0_30], %145 {strides = array<i32>} : memref<2x6xf32, #tpu.memory_space<vmem>>, vector<2x6xf32>,
    return
  }
}

</mosaic_0001>

<llo_original>
// kernel: mynet_forward.1
$region0: #{mynet_forward.1}
  #allocation0 [shape = 'u32[]', space=smem, size = 0x4, offset = 0x4, fixed_abs, tag = 'smem constant byte address 0x4 - core index']
  #allocation1 [shape = 'u32[144,128]{1,0:T(1,128)}', space=vmem, size = 0x12000, scoped, tag = 'internal scratch']
  %s0 = inlined_call_operand.vmem [shape: bf16[64,128], index: 0, kind: input, shape index: {}]
  %s1 = inlined_call_operand.vmem [shape: bf16[128,64], index: 1, kind: input, shape index: {}]
  %s2 = inlined_call_operand.vmem [shape: f32[592,64], index: 2, kind: input, shape index: {}]
  %s3 = inlined_call_operand.hbm [shape: f32[2,6], index: 3, kind: output, shape index: {}]
  %s4 = sld [smem:[#allocation0]]
  $region22: #{mynet_forward.1} parent=0
    _
  %s6 = ssub.s32 1, %s4
  %s7 = scalar_select 0, %s6, %s4
  $region1: #{mynet_forward.1} parent=0
    #allocation2 [shape = 'u8[1024]{0}', space=vmem, size = 0x400, scoped, tag = 'output window, operand 0, single buffered']
    #allocation3 [shape = 's32[1]{0}', space=sflag, size = 0x4, scoped, tag = 'scoped memory for mynet_forward.1']
    %8 = vsyncpa [#allocation3], 0
    // Predicated region
    $region2: #{mynet_forward.1} parent=1 // pred_check
      _
    $region3: #{mynet_forward.1} parent=1 // pred_check_branch
      %10 = sbr.rel (0) target = $region5
    $region4: #{mynet_forward.1} parent=1 // pred_region
      _
    $region5: #{mynet_forward.1} parent=1 // pred_fallthru
      _
    // Predicated region
    $region6: #{mynet_forward.1} parent=1 // pred_check
      _
    $region7: #{mynet_forward.1} parent=1 // pred_check_branch
      %12 = sbr.rel (0) target = $region9
    $region8: #{mynet_forward.1} parent=1 // pred_region
      _
    $region9: #{mynet_forward.1} parent=1 // pred_fallthru
      _
    // Predicated region
    $region10: #{mynet_forward.1} parent=1 // pred_check
      _
    $region11: #{mynet_forward.1} parent=1 // pred_check_branch
      %14 = sbr.rel (0) target = $region13
    $region12: #{mynet_forward.1} parent=1 // pred_region
      _
    $region13: #{mynet_forward.1} parent=1 // pred_fallthru
      _
    %v16 = vld [vmem:[%s0] sm:$0xf]
    %v17 = vld [vmem:[%s0 + $0x4] sm:$0xf]
    %v18 = vld [vmem:[%s0 + $0x8] sm:$0xf]
    %v19 = vld [vmem:[%s0 + $0xc] sm:$0xf]
    %v20 = vld [vmem:[%s0 + $0x10] sm:$0xf]
    %v21 = vld [vmem:[%s0 + $0x14] sm:$0xf]
    %v22 = vld [vmem:[%s0 + $0x18] sm:$0xf]
    %v23 = vld [vmem:[%s0 + $0x1c] sm:$0xf]
    %v24 = vld [vmem:[%s1] sm:$0xf]
    %v25 = vld [vmem:[%s1 + $0x4] sm:$0xf]
    %v26 = vld [vmem:[%s1 + $0x8] sm:$0xf]
    %v27 = vld [vmem:[%s1 + $0xc] sm:$0xf]
    %v28 = vld [vmem:[%s1 + $0x10] sm:$0xf]
    %v29 = vld [vmem:[%s1 + $0x14] sm:$0xf]
    %v30 = vld [vmem:[%s1 + $0x18] sm:$0xf]
    %v31 = vld [vmem:[%s1 + $0x1c] sm:$0xf]
    %v32 = vld [vmem:[%s1 + $0x20] sm:$0xf]
    %v33 = vld [vmem:[%s1 + $0x24] sm:$0xf]
    %v34 = vld [vmem:[%s1 + $0x28] sm:$0xf]
    %v35 = vld [vmem:[%s1 + $0x2c] sm:$0xf]
    %v36 = vld [vmem:[%s1 + $0x30] sm:$0xf]
    %v37 = vld [vmem:[%s1 + $0x34] sm:$0xf]
    %v38 = vld [vmem:[%s1 + $0x38] sm:$0xf]
    %v39 = vld [vmem:[%s1 + $0x3c] sm:$0xf]
    %v48 = vunpack.c.l.b16 %v16
    %v49 = vunpack.c.l.b16 %v17
    %v50 = vunpack.c.l.b16 %v18
    %v51 = vunpack.c.l.b16 %v19
    %v52 = vunpack.c.l.b16 %v20
    %v53 = vunpack.c.l.b16 %v21
    %v54 = vunpack.c.l.b16 %v22
    %v55 = vunpack.c.l.b16 %v23
    %v56 = vpack.c.b16 %v49, %v48
    %v57 = vpack.c.b16 %v51, %v50
    %v58 = vpack.c.b16 %v53, %v52
    %v59 = vpack.c.b16 %v55, %v54
    %v80 = vunpack.c.l.b16 %v24
    %v81 = vunpack.c.l.b16 %v25
    %v82 = vunpack.c.l.b16 %v26
    %v83 = vunpack.c.l.b16 %v27
    %v84 = vunpack.c.l.b16 %v28
    %v85 = vunpack.c.l.b16 %v29
    %v86 = vunpack.c.l.b16 %v30
    %v87 = vunpack.c.l.b16 %v31
    %v88 = vunpack.c.l.b16 %v32
    %v89 = vunpack.c.l.b16 %v33
    %v90 = vunpack.c.l.b16 %v34
    %v91 = vunpack.c.l.b16 %v35
    %v92 = vunpack.c.l.b16 %v36
    %v93 = vunpack.c.l.b16 %v37
    %v94 = vunpack.c.l.b16 %v38
    %v95 = vunpack.c.l.b16 %v39
    %v96 = vpack.c.b16 %v81, %v80
    %v97 = vpack.c.b16 %v83, %v82
    %v98 = vpack.c.b16 %v85, %v84
    %v99 = vpack.c.b16 %v87, %v86
    %v100 = vpack.c.b16 %v89, %v88
    %v101 = vpack.c.b16 %v91, %v90
    %v102 = vpack.c.b16 %v93, %v92
    %v103 = vpack.c.b16 %v95, %v94
    %112 = vmatprep.subr.bf16.mxu0 0
    %113 = vmatpush1.bf16.msra.mxu0 %v103
    %114 = vmatprep.subr.bf16.mxu0 0
    %115 = vmatpush1.bf16.msra.mxu0 %v102
    %116 = vmatprep.subr.bf16.mxu0 0
    %117 = vmatpush1.bf16.msra.mxu0 %v101
    %118 = vmatprep.subr.bf16.mxu0 0
    %119 = vmatpush1.bf16.msra.mxu0 %v100
    %120 = vmatprep.subr.bf16.mxu0 0
    %121 = vmatpush1.bf16.msra.mxu0 %v99
    %122 = vmatprep.subr.bf16.mxu0 0
    %123 = vmatpush1.bf16.msra.mxu0 %v98
    %124 = vmatprep.subr.bf16.mxu0 0
    %125 = vmatpush1.bf16.msra.mxu0 %v97
    %126 = vmatprep.subr.bf16.mxu0 0
    %127 = vmatpush1.bf16.msra.mxu0 %v96
    %128 = vmatprep.subr.bf16.mxu0 0
    %129 = vmatpush2.bf16.msra.mxu0 0
    %130 = vmatprep.subr.bf16.mxu0 0
    %131 = vmatpush2.bf16.msra.mxu0 0
    %132 = vmatprep.subr.bf16.mxu0 0
    %133 = vmatpush2.bf16.msra.mxu0 0
    %134 = vmatprep.subr.bf16.mxu0 0
    %135 = vmatpush2.bf16.msra.mxu0 0
    %136 = vmatprep.subr.bf16.mxu0 0
    %137 = vmatpush2.bf16.msra.mxu0 0
    %138 = vmatprep.subr.bf16.mxu0 0
    %139 = vmatpush2.bf16.msra.mxu0 0
    %140 = vmatprep.subr.bf16.mxu0 0
    %141 = vmatpush2.bf16.msra.mxu0 0
    %142 = vmatprep.subr.bf16.mxu0 0
    %143 = vmatpush2.bf16.msra.mxu0 0
    %144 = vmatprep.mubr.bf16.mxu0 0
    %145 = vmatmul.mubr.bf16.gmra.mxu0 %v56
    %v146 = vpop.f32.mrf.mxu0
    %v147 = vadd.f32 0.0, %v146
    %v148 = vpop.f32.mrf.mxu0
    %v149 = vpop.f32.mrf.mxu0
    %v150 = vadd.f32 0.0, %v149
    %v151 = vpop.f32.mrf.mxu0
    %152 = vmatprep.mubr.bf16.mxu0 0
    %153 = vmatmul.mubr.bf16.gmra.mxu0 %v57
    %v154 = vpop.f32.mrf.mxu0
    %v155 = vadd.f32 0.0, %v154
    %v156 = vpop.f32.mrf.mxu0
    %v157 = vpop.f32.mrf.mxu0
    %v158 = vadd.f32 0.0, %v157
    %v159 = vpop.f32.mrf.mxu0
    %160 = vmatprep.mubr.bf16.mxu0 0
    %161 = vmatmul.mubr.bf16.gmra.mxu0 %v58
    %v162 = vpop.f32.mrf.mxu0
    %v163 = vadd.f32 0.0, %v162
    %v164 = vpop.f32.mrf.mxu0
    %v165 = vpop.f32.mrf.mxu0
    %v166 = vadd.f32 0.0, %v165
    %v167 = vpop.f32.mrf.mxu0
    %168 = vmatprep.mubr.bf16.mxu0 0
    %169 = vmatmul.mubr.bf16.gmra.mxu0 %v59
    %v170 = vpop.f32.mrf.mxu0
    %v171 = vadd.f32 0.0, %v170
    %v172 = vpop.f32.mrf.mxu0
    %v173 = vpop.f32.mrf.mxu0
    %v174 = vadd.f32 0.0, %v173
    %v175 = vpop.f32.mrf.mxu0
    %176 = vdwg.mxu0
    %185 = vrot.lane.b32.xlu0 %v147, 112
    %v186 = vpop.permute.xlu0 %185
    %187 = vrot.lane.b32.xlu0 %v150, 112
    %v188 = vpop.permute.xlu0 %187
    %189 = vrot.lane.b32.xlu0 %v155, 112
    %v190 = vpop.permute.xlu0 %189
    %191 = vrot.lane.b32.xlu0 %v158, 112
    %v192 = vpop.permute.xlu0 %191
    %193 = vrot.lane.b32.xlu0 %v163, 112
    %v194 = vpop.permute.xlu0 %193
    %195 = vrot.lane.b32.xlu0 %v166, 112
    %v196 = vpop.permute.xlu0 %195
    %197 = vrot.lane.b32.xlu0 %v171, 112
    %v198 = vpop.permute.xlu0 %197
    %199 = vrot.lane.b32.xlu0 %v174, 112
    %v200 = vpop.permute.xlu0 %199
    %v209 = vmax.f32 %v147, %v186
    %v210 = vmax.f32 %v150, %v188
    %v211 = vmax.f32 %v155, %v190
    %v212 = vmax.f32 %v158, %v192
    %v213 = vmax.f32 %v163, %v194
    %v214 = vmax.f32 %v166, %v196
    %v215 = vmax.f32 %v171, %v198
    %v216 = vmax.f32 %v174, %v200
    %225 = vrot.lane.b32.xlu0 %v209, 96
    %v226 = vpop.permute.xlu0 %225
    %227 = vrot.lane.b32.xlu0 %v210, 96
    %v228 = vpop.permute.xlu0 %227
    %229 = vrot.lane.b32.xlu0 %v211, 96
    %v230 = vpop.permute.xlu0 %229
    %231 = vrot.lane.b32.xlu0 %v212, 96
    %v232 = vpop.permute.xlu0 %231
    %233 = vrot.lane.b32.xlu0 %v213, 96
    %v234 = vpop.permute.xlu0 %233
    %235 = vrot.lane.b32.xlu0 %v214, 96
    %v236 = vpop.permute.xlu0 %235
    %237 = vrot.lane.b32.xlu0 %v215, 96
    %v238 = vpop.permute.xlu0 %237
    %239 = vrot.lane.b32.xlu0 %v216, 96
    %v240 = vpop.permute.xlu0 %239
    %v249 = vmax.f32 %v209, %v226
    %v250 = vmax.f32 %v210, %v228
    %v251 = vmax.f32 %v211, %v230
    %v252 = vmax.f32 %v212, %v232
    %v253 = vmax.f32 %v213, %v234
    %v254 = vmax.f32 %v214, %v236
    %v255 = vmax.f32 %v215, %v238
    %v256 = vmax.f32 %v216, %v240
    %v257 = vmax.f32 %v249, 0.0
    %v258 = vmax.f32 %v250, 0.0
    %v259 = vmax.f32 %v251, 0.0
    %v260 = vmax.f32 %v252, 0.0
    %v261 = vmax.f32 %v253, 0.0
    %v262 = vmax.f32 %v254, 0.0
    %v263 = vmax.f32 %v255, 0.0
    %v264 = vmax.f32 %v256, 0.0
    %v265 = vld [vmem:[%s2] sm:$0xff]
    %v266 = vld [vmem:[%s2 + $0x8] sm:$0xff]
    %v267 = vld [vmem:[%s2 + $0x10] sm:$0xff]
    %v268 = vld [vmem:[%s2 + $0x18] sm:$0xff]
    %270 = vset.pattern.permute.xlu0 0
    %271 = vperm.xlu0 %270, %v257
    %v272 = vpop.permute.xlu0 %271
    %275 = vset.pattern.permute.xlu0 0
    %276 = vperm.xlu0 %275, %v258
    %v277 = vpop.permute.xlu0 %276
    %280 = vset.pattern.permute.xlu0 0
    %281 = vperm.xlu0 %280, %v259
    %v282 = vpop.permute.xlu0 %281
    %285 = vset.pattern.permute.xlu0 0
    %286 = vperm.xlu0 %285, %v260
    %v287 = vpop.permute.xlu0 %286
    %290 = vset.pattern.permute.xlu0 0
    %291 = vperm.xlu0 %290, %v261
    %v292 = vpop.permute.xlu0 %291
    %295 = vset.pattern.permute.xlu0 0
    %296 = vperm.xlu0 %295, %v262
    %v297 = vpop.permute.xlu0 %296
    %300 = vset.pattern.permute.xlu0 0
    %301 = vperm.xlu0 %300, %v263
    %v302 = vpop.permute.xlu0 %301
    %305 = vset.pattern.permute.xlu0 0
    %306 = vperm.xlu0 %305, %v264
    %v307 = vpop.permute.xlu0 %306
    %v309 = vmul.f32 %v272, %v265
    %v310 = vmul.f32 %v277, %v266
    %v311 = vmul.f32 %v282, %v267
    %v312 = vmul.f32 %v287, %v268
    %v313 = vmul.f32 %v292, %v265
    %v314 = vmul.f32 %v297, %v266
    %v315 = vmul.f32 %v302, %v267
    %v316 = vmul.f32 %v307, %v268
    %v317 = vld [vmem:[%s2 + $0x20] sm:$0xff]
    %v318 = vld [vmem:[%s2 + $0x28] sm:$0xff]
    %v319 = vld [vmem:[%s2 + $0x30] sm:$0xff]
    %v320 = vld [vmem:[%s2 + $0x38] sm:$0xff]
    %321 = vset.pattern.permute.xlu0 1
    %322 = vperm.xlu0 %321, %v257
    %v323 = vpop.permute.xlu0 %322
    %325 = vset.pattern.permute.xlu0 1
    %326 = vperm.xlu0 %325, %v258
    %v327 = vpop.permute.xlu0 %326
    %329 = vset.pattern.permute.xlu0 1
    %330 = vperm.xlu0 %329, %v259
    %v331 = vpop.permute.xlu0 %330
    %333 = vset.pattern.permute.xlu0 1
    %334 = vperm.xlu0 %333, %v260
    %v335 = vpop.permute.xlu0 %334
    %337 = vset.pattern.permute.xlu0 1
    %338 = vperm.xlu0 %337, %v261
    %v339 = vpop.permute.xlu0 %338
    %341 = vset.pattern.permute.xlu0 1
    %342 = vperm.xlu0 %341, %v262
    %v343 = vpop.permute.xlu0 %342
    %345 = vset.pattern.permute.xlu0 1
    %346 = vperm.xlu0 %345, %v263
    %v347 = vpop.permute.xlu0 %346
    %349 = vset.pattern.permute.xlu0 1
    %350 = vperm.xlu0 %349, %v264
    %v351 = vpop.permute.xlu0 %350
    %v353 = vmul.f32 %v323, %v317
    %v354 = vmul.f32 %v327, %v318
    %v355 = vmul.f32 %v331, %v319
    %v356 = vmul.f32 %v335, %v320
    %v357 = vmul.f32 %v339, %v317
    %v358 = vmul.f32 %v343, %v318
    %v359 = vmul.f32 %v347, %v319
    %v360 = vmul.f32 %v351, %v320
    %v361 = vld [vmem:[%s2 + $0x40] sm:$0xff]
    %v362 = vld [vmem:[%s2 + $0x48] sm:$0xff]
    %v363 = vld [vmem:[%s2 + $0x50] sm:$0xff]
    %v364 = vld [vmem:[%s2 + $0x58] sm:$0xff]
    %365 = vset.pattern.permute.xlu0 2
    %366 = vperm.xlu0 %365, %v257
    %v367 = vpop.permute.xlu0 %366
    %369 = vset.pattern.permute.xlu0 2
    %370 = vperm.xlu0 %369, %v258
    %v371 = vpop.permute.xlu0 %370
    %373 = vset.pattern.permute.xlu0 2
    %374 = vperm.xlu0 %373, %v259
    %v375 = vpop.permute.xlu0 %374
    %377 = vset.pattern.permute.xlu0 2
    %378 = vperm.xlu0 %377, %v260
    %v379 = vpop.permute.xlu0 %378
    %381 = vset.pattern.permute.xlu0 2
    %382 = vperm.xlu0 %381, %v261
    %v383 = vpop.permute.xlu0 %382
    %385 = vset.pattern.permute.xlu0 2
    %386 = vperm.xlu0 %385, %v262
    %v387 = vpop.permute.xlu0 %386
    %389 = vset.pattern.permute.xlu0 2
    %390 = vperm.xlu0 %389, %v263
    %v391 = vpop.permute.xlu0 %390
    %393 = vset.pattern.permute.xlu0 2
    %394 = vperm.xlu0 %393, %v264
    %v395 = vpop.permute.xlu0 %394
    %v397 = vmul.f32 %v367, %v361
    %v398 = vmul.f32 %v371, %v362
    %v399 = vmul.f32 %v375, %v363
    %v400 = vmul.f32 %v379, %v364
    %v401 = vmul.f32 %v383, %v361
    %v402 = vmul.f32 %v387, %v362
    %v403 = vmul.f32 %v391, %v363
    %v404 = vmul.f32 %v395, %v364
    %v405 = vld [vmem:[%s2 + $0x60] sm:$0xff]
    %v406 = vld [vmem:[%s2 + $0x68] sm:$0xff]
    %v407 = vld [vmem:[%s2 + $0x70] sm:$0xff]
    %v408 = vld [vmem:[%s2 + $0x78] sm:$0xff]
    %409 = vset.pattern.permute.xlu0 3
    %410 = vperm.xlu0 %409, %v257
    %v411 = vpop.permute.xlu0 %410
    %413 = vset.pattern.permute.xlu0 3
    %414 = vperm.xlu0 %413, %v258
    %v415 = vpop.permute.xlu0 %414
    %417 = vset.pattern.permute.xlu0 3
    %418 = vperm.xlu0 %417, %v259
    %v419 = vpop.permute.xlu0 %418
    %421 = vset.pattern.permute.xlu0 3
    %422 = vperm.xlu0 %421, %v260
    %v423 = vpop.permute.xlu0 %422
    %425 = vset.pattern.permute.xlu0 3
    %426 = vperm.xlu0 %425, %v261
    %v427 = vpop.permute.xlu0 %426
    %429 = vset.pattern.permute.xlu0 3
    %430 = vperm.xlu0 %429, %v262
    %v431 = vpop.permute.xlu0 %430
    %433 = vset.pattern.permute.xlu0 3
    %434 = vperm.xlu0 %433, %v263
    %v435 = vpop.permute.xlu0 %434
    %437 = vset.pattern.permute.xlu0 3
    %438 = vperm.xlu0 %437, %v264
    %v439 = vpop.permute.xlu0 %438
    %v441 = vmul.f32 %v411, %v405
    %v442 = vmul.f32 %v415, %v406
    %v443 = vmul.f32 %v419, %v407
    %v444 = vmul.f32 %v423, %v408
    %v445 = vmul.f32 %v427, %v405
    %v446 = vmul.f32 %v431, %v406
    %v447 = vmul.f32 %v435, %v407
    %v448 = vmul.f32 %v439, %v408
    %v449 = vld [vmem:[%s2 + $0x80] sm:$0xff]
    %v450 = vld [vmem:[%s2 + $0x88] sm:$0xff]
    %v451 = vld [vmem:[%s2 + $0x90] sm:$0xff]
    %v452 = vld [vmem:[%s2 + $0x98] sm:$0xff]
    %453 = vset.pattern.permute.xlu0 4
    %454 = vperm.xlu0 %453, %v257
    %v455 = vpop.permute.xlu0 %454
    %457 = vset.pattern.permute.xlu0 4
    %458 = vperm.xlu0 %457, %v258
    %v459 = vpop.permute.xlu0 %458
    %461 = vset.pattern.permute.xlu0 4
    %462 = vperm.xlu0 %461, %v259
    %v463 = vpop.permute.xlu0 %462
    %465 = vset.pattern.permute.xlu0 4
    %466 = vperm.xlu0 %465, %v260
    %v467 = vpop.permute.xlu0 %466
    %469 = vset.pattern.permute.xlu0 4
    %470 = vperm.xlu0 %469, %v261
    %v471 = vpop.permute.xlu0 %470
    %473 = vset.pattern.permute.xlu0 4
    %474 = vperm.xlu0 %473, %v262
    %v475 = vpop.permute.xlu0 %474
    %477 = vset.pattern.permute.xlu0 4
    %478 = vperm.xlu0 %477, %v263
    %v479 = vpop.permute.xlu0 %478
    %481 = vset.pattern.permute.xlu0 4
    %482 = vperm.xlu0 %481, %v264
    %v483 = vpop.permute.xlu0 %482
    %v485 = vmul.f32 %v455, %v449
    %v486 = vmul.f32 %v459, %v450
    %v487 = vmul.f32 %v463, %v451
    %v488 = vmul.f32 %v467, %v452
    %v489 = vmul.f32 %v471, %v449
    %v490 = vmul.f32 %v475, %v450
    %v491 = vmul.f32 %v479, %v451
    %v492 = vmul.f32 %v483, %v452
    %v493 = vadd.f32 %v309, %v485
    %v494 = vadd.f32 %v310, %v486
    %v495 = vadd.f32 %v311, %v487
    %v496 = vadd.f32 %v312, %v488
    %v497 = vadd.f32 %v313, %v489
    %v498 = vadd.f32 %v314, %v490
    %v499 = vadd.f32 %v315, %v491
    %v500 = vadd.f32 %v316, %v492
    %v501 = vld [vmem:[%s2 + $0xa0] sm:$0xff]
    %v502 = vld [vmem:[%s2 + $0xa8] sm:$0xff]
    %v503 = vld [vmem:[%s2 + $0xb0] sm:$0xff]
    %v504 = vld [vmem:[%s2 + $0xb8] sm:$0xff]
    %505 = vset.pattern.permute.xlu0 5
    %506 = vperm.xlu0 %505, %v257
    %v507 = vpop.permute.xlu0 %506
    %509 = vset.pattern.permute.xlu0 5
    %510 = vperm.xlu0 %509, %v258
    %v511 = vpop.permute.xlu0 %510
    %513 = vset.pattern.permute.xlu0 5
    %514 = vperm.xlu0 %513, %v259
    %v515 = vpop.permute.xlu0 %514
    %517 = vset.pattern.permute.xlu0 5
    %518 = vperm.xlu0 %517, %v260
    %v519 = vpop.permute.xlu0 %518
    %521 = vset.pattern.permute.xlu0 5
    %522 = vperm.xlu0 %521, %v261
    %v523 = vpop.permute.xlu0 %522
    %525 = vset.pattern.permute.xlu0 5
    %526 = vperm.xlu0 %525, %v262
    %v527 = vpop.permute.xlu0 %526
    %529 = vset.pattern.permute.xlu0 5
    %530 = vperm.xlu0 %529, %v263
    %v531 = vpop.permute.xlu0 %530
    %533 = vset.pattern.permute.xlu0 5
    %534 = vperm.xlu0 %533, %v264
    %v535 = vpop.permute.xlu0 %534
    %v537 = vmul.f32 %v507, %v501
    %v538 = vmul.f32 %v511, %v502
    %v539 = vmul.f32 %v515, %v503
    %v540 = vmul.f32 %v519, %v504
    %v541 = vmul.f32 %v523, %v501
    %v542 = vmul.f32 %v527, %v502
    %v543 = vmul.f32 %v531, %v503
    %v544 = vmul.f32 %v535, %v504
    %v545 = vadd.f32 %v353, %v537
    %v546 = vadd.f32 %v354, %v538
    %v547 = vadd.f32 %v355, %v539
    %v548 = vadd.f32 %v356, %v540
    %v549 = vadd.f32 %v357, %v541
    %v550 = vadd.f32 %v358, %v542
    %v551 = vadd.f32 %v359, %v543
    %v552 = vadd.f32 %v360, %v544
    %v553 = vld [vmem:[%s2 + $0xc0] sm:$0xff]
    %v554 = vld [vmem:[%s2 + $0xc8] sm:$0xff]
    %v555 = vld [vmem:[%s2 + $0xd0] sm:$0xff]
    %v556 = vld [vmem:[%s2 + $0xd8] sm:$0xff]
    %557 = vset.pattern.permute.xlu0 6
    %558 = vperm.xlu0 %557, %v257
    %v559 = vpop.permute.xlu0 %558
    %561 = vset.pattern.permute.xlu0 6
    %562 = vperm.xlu0 %561, %v258
    %v563 = vpop.permute.xlu0 %562
    %565 = vset.pattern.permute.xlu0 6
    %566 = vperm.xlu0 %565, %v259
    %v567 = vpop.permute.xlu0 %566
    %569 = vset.pattern.permute.xlu0 6
    %570 = vperm.xlu0 %569, %v260
    %v571 = vpop.permute.xlu0 %570
    %573 = vset.pattern.permute.xlu0 6
    %574 = vperm.xlu0 %573, %v261
    %v575 = vpop.permute.xlu0 %574
    %577 = vset.pattern.permute.xlu0 6
    %578 = vperm.xlu0 %577, %v262
    %v579 = vpop.permute.xlu0 %578
    %581 = vset.pattern.permute.xlu0 6
    %582 = vperm.xlu0 %581, %v263
    %v583 = vpop.permute.xlu0 %582
    %585 = vset.pattern.permute.xlu0 6
    %586 = vperm.xlu0 %585, %v264
    %v587 = vpop.permute.xlu0 %586
    %v589 = vmul.f32 %v559, %v553
    %v590 = vmul.f32 %v563, %v554
    %v591 = vmul.f32 %v567, %v555
    %v592 = vmul.f32 %v571, %v556
    %v593 = vmul.f32 %v575, %v553
    %v594 = vmul.f32 %v579, %v554
    %v595 = vmul.f32 %v583, %v555
    %v596 = vmul.f32 %v587, %v556
    %v597 = vadd.f32 %v397, %v589
    %v598 = vadd.f32 %v398, %v590
    %v599 = vadd.f32 %v399, %v591
    %v600 = vadd.f32 %v400, %v592
    %v601 = vadd.f32 %v401, %v593
    %v602 = vadd.f32 %v402, %v594
    %v603 = vadd.f32 %v403, %v595
    %v604 = vadd.f32 %v404, %v596
    %v605 = vld [vmem:[%s2 + $0xe0] sm:$0xff]
    %v606 = vld [vmem:[%s2 + $0xe8] sm:$0xff]
    %v607 = vld [vmem:[%s2 + $0xf0] sm:$0xff]
    %v608 = vld [vmem:[%s2 + $0xf8] sm:$0xff]
    %609 = vset.pattern.permute.xlu0 7
    %610 = vperm.xlu0 %609, %v257
    %v611 = vpop.permute.xlu0 %610
    %613 = vset.pattern.permute.xlu0 7
    %614 = vperm.xlu0 %613, %v258
    %v615 = vpop.permute.xlu0 %614
    %617 = vset.pattern.permute.xlu0 7
    %618 = vperm.xlu0 %617, %v259
    %v619 = vpop.permute.xlu0 %618
    %621 = vset.pattern.permute.xlu0 7
    %622 = vperm.xlu0 %621, %v260
    %v623 = vpop.permute.xlu0 %622
    %625 = vset.pattern.permute.xlu0 7
    %626 = vperm.xlu0 %625, %v261
    %v627 = vpop.permute.xlu0 %626
    %629 = vset.pattern.permute.xlu0 7
    %630 = vperm.xlu0 %629, %v262
    %v631 = vpop.permute.xlu0 %630
    %633 = vset.pattern.permute.xlu0 7
    %634 = vperm.xlu0 %633, %v263
    %v635 = vpop.permute.xlu0 %634
    %637 = vset.pattern.permute.xlu0 7
    %638 = vperm.xlu0 %637, %v264
    %v639 = vpop.permute.xlu0 %638
    %v641 = vmul.f32 %v611, %v605
    %v642 = vmul.f32 %v615, %v606
    %v643 = vmul.f32 %v619, %v607
    %v644 = vmul.f32 %v623, %v608
    %v645 = vmul.f32 %v627, %v605
    %v646 = vmul.f32 %v631, %v606
    %v647 = vmul.f32 %v635, %v607
    %v648 = vmul.f32 %v639, %v608
    %v649 = vadd.f32 %v441, %v641
    %v650 = vadd.f32 %v442, %v642
    %v651 = vadd.f32 %v443, %v643
    %v652 = vadd.f32 %v444, %v644
    %v653 = vadd.f32 %v445, %v645
    %v654 = vadd.f32 %v446, %v646
    %v655 = vadd.f32 %v447, %v647
    %v656 = vadd.f32 %v448, %v648
    %v657 = vld [vmem:[%s2 + $0x100] sm:$0xff]
    %v658 = vld [vmem:[%s2 + $0x108] sm:$0xff]
    %v659 = vld [vmem:[%s2 + $0x110] sm:$0xff]
    %v660 = vld [vmem:[%s2 + $0x118] sm:$0xff]
    %661 = vset.pattern.permute.xlu0 8
    %662 = vperm.xlu0 %661, %v257
    %v663 = vpop.permute.xlu0 %662
    %665 = vset.pattern.permute.xlu0 8
    %666 = vperm.xlu0 %665, %v258
    %v667 = vpop.permute.xlu0 %666
    %669 = vset.pattern.permute.xlu0 8
    %670 = vperm.xlu0 %669, %v259
    %v671 = vpop.permute.xlu0 %670
    %673 = vset.pattern.permute.xlu0 8
    %674 = vperm.xlu0 %673, %v260
    %v675 = vpop.permute.xlu0 %674
    %677 = vset.pattern.permute.xlu0 8
    %678 = vperm.xlu0 %677, %v261
    %v679 = vpop.permute.xlu0 %678
    %681 = vset.pattern.permute.xlu0 8
    %682 = vperm.xlu0 %681, %v262
    %v683 = vpop.permute.xlu0 %682
    %685 = vset.pattern.permute.xlu0 8
    %686 = vperm.xlu0 %685, %v263
    %v687 = vpop.permute.xlu0 %686
    %689 = vset.pattern.permute.xlu0 8
    %690 = vperm.xlu0 %689, %v264
    %v691 = vpop.permute.xlu0 %690
    %v693 = vmul.f32 %v663, %v657
    %v694 = vmul.f32 %v667, %v658
    %v695 = vmul.f32 %v671, %v659
    %v696 = vmul.f32 %v675, %v660
    %v697 = vmul.f32 %v679, %v657
    %v698 = vmul.f32 %v683, %v658
    %v699 = vmul.f32 %v687, %v659
    %v700 = vmul.f32 %v691, %v660
    %v701 = vadd.f32 %v493, %v693
    %v702 = vadd.f32 %v494, %v694
    %v703 = vadd.f32 %v495, %v695
    %v704 = vadd.f32 %v496, %v696
    %v705 = vadd.f32 %v497, %v697
    %v706 = vadd.f32 %v498, %v698
    %v707 = vadd.f32 %v499, %v699
    %v708 = vadd.f32 %v500, %v700
    %v709 = vld [vmem:[%s2 + $0x120] sm:$0xff]
    %v710 = vld [vmem:[%s2 + $0x128] sm:$0xff]
    %v711 = vld [vmem:[%s2 + $0x130] sm:$0xff]
    %v712 = vld [vmem:[%s2 + $0x138] sm:$0xff]
    %713 = vset.pattern.permute.xlu0 9
    %714 = vperm.xlu0 %713, %v257
    %v715 = vpop.permute.xlu0 %714
    %717 = vset.pattern.permute.xlu0 9
    %718 = vperm.xlu0 %717, %v258
    %v719 = vpop.permute.xlu0 %718
    %721 = vset.pattern.permute.xlu0 9
    %722 = vperm.xlu0 %721, %v259
    %v723 = vpop.permute.xlu0 %722
    %725 = vset.pattern.permute.xlu0 9
    %726 = vperm.xlu0 %725, %v260
    %v727 = vpop.permute.xlu0 %726
    %729 = vset.pattern.permute.xlu0 9
    %730 = vperm.xlu0 %729, %v261
    %v731 = vpop.permute.xlu0 %730
    %733 = vset.pattern.permute.xlu0 9
    %734 = vperm.xlu0 %733, %v262
    %v735 = vpop.permute.xlu0 %734
    %737 = vset.pattern.permute.xlu0 9
    %738 = vperm.xlu0 %737, %v263
    %v739 = vpop.permute.xlu0 %738
    %741 = vset.pattern.permute.xlu0 9
    %742 = vperm.xlu0 %741, %v264
    %v743 = vpop.permute.xlu0 %742
    %v745 = vmul.f32 %v715, %v709
    %v746 = vmul.f32 %v719, %v710
    %v747 = vmul.f32 %v723, %v711
    %v748 = vmul.f32 %v727, %v712
    %v749 = vmul.f32 %v731, %v709
    %v750 = vmul.f32 %v735, %v710
    %v751 = vmul.f32 %v739, %v711
    %v752 = vmul.f32 %v743, %v712
    %v753 = vadd.f32 %v545, %v745
    %v754 = vadd.f32 %v546, %v746
    %v755 = vadd.f32 %v547, %v747
    %v756 = vadd.f32 %v548, %v748
    %v757 = vadd.f32 %v549, %v749
    %v758 = vadd.f32 %v550, %v750
    %v759 = vadd.f32 %v551, %v751
    %v760 = vadd.f32 %v552, %v752
    %v761 = vld [vmem:[%s2 + $0x140] sm:$0xff]
    %v762 = vld [vmem:[%s2 + $0x148] sm:$0xff]
    %v763 = vld [vmem:[%s2 + $0x150] sm:$0xff]
    %v764 = vld [vmem:[%s2 + $0x158] sm:$0xff]
    %765 = vset.pattern.permute.xlu0 10
    %766 = vperm.xlu0 %765, %v257
    %v767 = vpop.permute.xlu0 %766
    %769 = vset.pattern.permute.xlu0 10
    %770 = vperm.xlu0 %769, %v258
    %v771 = vpop.permute.xlu0 %770
    %773 = vset.pattern.permute.xlu0 10
    %774 = vperm.xlu0 %773, %v259
    %v775 = vpop.permute.xlu0 %774
    %777 = vset.pattern.permute.xlu0 10
    %778 = vperm.xlu0 %777, %v260
    %v779 = vpop.permute.xlu0 %778
    %781 = vset.pattern.permute.xlu0 10
    %782 = vperm.xlu0 %781, %v261
    %v783 = vpop.permute.xlu0 %782
    %785 = vset.pattern.permute.xlu0 10
    %786 = vperm.xlu0 %785, %v262
    %v787 = vpop.permute.xlu0 %786
    %789 = vset.pattern.permute.xlu0 10
    %790 = vperm.xlu0 %789, %v263
    %v791 = vpop.permute.xlu0 %790
    %793 = vset.pattern.permute.xlu0 10
    %794 = vperm.xlu0 %793, %v264
    %v795 = vpop.permute.xlu0 %794
    %v797 = vmul.f32 %v767, %v761
    %v798 = vmul.f32 %v771, %v762
    %v799 = vmul.f32 %v775, %v763
    %v800 = vmul.f32 %v779, %v764
    %v801 = vmul.f32 %v783, %v761
    %v802 = vmul.f32 %v787, %v762
    %v803 = vmul.f32 %v791, %v763
    %v804 = vmul.f32 %v795, %v764
    %v805 = vadd.f32 %v597, %v797
    %v806 = vadd.f32 %v598, %v798
    %v807 = vadd.f32 %v599, %v799
    %v808 = vadd.f32 %v600, %v800
    %v809 = vadd.f32 %v601, %v801
    %v810 = vadd.f32 %v602, %v802
    %v811 = vadd.f32 %v603, %v803
    %v812 = vadd.f32 %v604, %v804
    %v813 = vld [vmem:[%s2 + $0x160] sm:$0xff]
    %v814 = vld [vmem:[%s2 + $0x168] sm:$0xff]
    %v815 = vld [vmem:[%s2 + $0x170] sm:$0xff]
    %v816 = vld [vmem:[%s2 + $0x178] sm:$0xff]
    %817 = vset.pattern.permute.xlu0 11
    %818 = vperm.xlu0 %817, %v257
    %v819 = vpop.permute.xlu0 %818
    %821 = vset.pattern.permute.xlu0 11
    %822 = vperm.xlu0 %821, %v258
    %v823 = vpop.permute.xlu0 %822
    %825 = vset.pattern.permute.xlu0 11
    %826 = vperm.xlu0 %825, %v259
    %v827 = vpop.permute.xlu0 %826
    %829 = vset.pattern.permute.xlu0 11
    %830 = vperm.xlu0 %829, %v260
    %v831 = vpop.permute.xlu0 %830
    %833 = vset.pattern.permute.xlu0 11
    %834 = vperm.xlu0 %833, %v261
    %v835 = vpop.permute.xlu0 %834
    %837 = vset.pattern.permute.xlu0 11
    %838 = vperm.xlu0 %837, %v262
    %v839 = vpop.permute.xlu0 %838
    %841 = vset.pattern.permute.xlu0 11
    %842 = vperm.xlu0 %841, %v263
    %v843 = vpop.permute.xlu0 %842
    %845 = vset.pattern.permute.xlu0 11
    %846 = vperm.xlu0 %845, %v264
    %v847 = vpop.permute.xlu0 %846
    %v849 = vmul.f32 %v819, %v813
    %v850 = vmul.f32 %v823, %v814
    %v851 = vmul.f32 %v827, %v815
    %v852 = vmul.f32 %v831, %v816
    %v853 = vmul.f32 %v835, %v813
    %v854 = vmul.f32 %v839, %v814
    %v855 = vmul.f32 %v843, %v815
    %v856 = vmul.f32 %v847, %v816
    %v857 = vadd.f32 %v649, %v849
    %v858 = vadd.f32 %v650, %v850
    %v859 = vadd.f32 %v651, %v851
    %v860 = vadd.f32 %v652, %v852
    %v861 = vadd.f32 %v653, %v853
    %v862 = vadd.f32 %v654, %v854
    %v863 = vadd.f32 %v655, %v855
    %v864 = vadd.f32 %v656, %v856
    %v865 = vld [vmem:[%s2 + $0x180] sm:$0xff]
    %v866 = vld [vmem:[%s2 + $0x188] sm:$0xff]
    %v867 = vld [vmem:[%s2 + $0x190] sm:$0xff]
    %v868 = vld [vmem:[%s2 + $0x198] sm:$0xff]
    %869 = vset.pattern.permute.xlu0 12
    %870 = vperm.xlu0 %869, %v257
    %v871 = vpop.permute.xlu0 %870
    %873 = vset.pattern.permute.xlu0 12
    %874 = vperm.xlu0 %873, %v258
    %v875 = vpop.permute.xlu0 %874
    %877 = vset.pattern.permute.xlu0 12
    %878 = vperm.xlu0 %877, %v259
    %v879 = vpop.permute.xlu0 %878
    %881 = vset.pattern.permute.xlu0 12
    %882 = vperm.xlu0 %881, %v260
    %v883 = vpop.permute.xlu0 %882
    %885 = vset.pattern.permute.xlu0 12
    %886 = vperm.xlu0 %885, %v261
    %v887 = vpop.permute.xlu0 %886
    %889 = vset.pattern.permute.xlu0 12
    %890 = vperm.xlu0 %889, %v262
    %v891 = vpop.permute.xlu0 %890
    %893 = vset.pattern.permute.xlu0 12
    %894 = vperm.xlu0 %893, %v263
    %v895 = vpop.permute.xlu0 %894
    %897 = vset.pattern.permute.xlu0 12
    %898 = vperm.xlu0 %897, %v264
    %v899 = vpop.permute.xlu0 %898
    %v901 = vmul.f32 %v871, %v865
    %v902 = vmul.f32 %v875, %v866
    %v903 = vmul.f32 %v879, %v867
    %v904 = vmul.f32 %v883, %v868
    %v905 = vmul.f32 %v887, %v865
    %v906 = vmul.f32 %v891, %v866
    %v907 = vmul.f32 %v895, %v867
    %v908 = vmul.f32 %v899, %v868
    %v909 = vadd.f32 %v701, %v901
    %v910 = vadd.f32 %v702, %v902
    %v911 = vadd.f32 %v703, %v903
    %v912 = vadd.f32 %v704, %v904
    %v913 = vadd.f32 %v705, %v905
    %v914 = vadd.f32 %v706, %v906
    %v915 = vadd.f32 %v707, %v907
    %v916 = vadd.f32 %v708, %v908
    %v917 = vld [vmem:[%s2 + $0x1a0] sm:$0xff]
    %v918 = vld [vmem:[%s2 + $0x1a8] sm:$0xff]
    %v919 = vld [vmem:[%s2 + $0x1b0] sm:$0xff]
    %v920 = vld [vmem:[%s2 + $0x1b8] sm:$0xff]
    %921 = vset.pattern.permute.xlu0 13
    %922 = vperm.xlu0 %921, %v257
    %v923 = vpop.permute.xlu0 %922
    %925 = vset.pattern.permute.xlu0 13
    %926 = vperm.xlu0 %925, %v258
    %v927 = vpop.permute.xlu0 %926
    %929 = vset.pattern.permute.xlu0 13
    %930 = vperm.xlu0 %929, %v259
    %v931 = vpop.permute.xlu0 %930
    %933 = vset.pattern.permute.xlu0 13
    %934 = vperm.xlu0 %933, %v260
    %v935 = vpop.permute.xlu0 %934
    %937 = vset.pattern.permute.xlu0 13
    %938 = vperm.xlu0 %937, %v261
    %v939 = vpop.permute.xlu0 %938
    %941 = vset.pattern.permute.xlu0 13
    %942 = vperm.xlu0 %941, %v262
    %v943 = vpop.permute.xlu0 %942
    %945 = vset.pattern.permute.xlu0 13
    %946 = vperm.xlu0 %945, %v263
    %v947 = vpop.permute.xlu0 %946
    %949 = vset.pattern.permute.xlu0 13
    %950 = vperm.xlu0 %949, %v264
    %v951 = vpop.permute.xlu0 %950
    %v953 = vmul.f32 %v923, %v917
    %v954 = vmul.f32 %v927, %v918
    %v955 = vmul.f32 %v931, %v919
    %v956 = vmul.f32 %v935, %v920
    %v957 = vmul.f32 %v939, %v917
    %v958 = vmul.f32 %v943, %v918
    %v959 = vmul.f32 %v947, %v919
    %v960 = vmul.f32 %v951, %v920
    %v961 = vadd.f32 %v753, %v953
    %v962 = vadd.f32 %v754, %v954
    %v963 = vadd.f32 %v755, %v955
    %v964 = vadd.f32 %v756, %v956
    %v965 = vadd.f32 %v757, %v957
    %v966 = vadd.f32 %v758, %v958
    %v967 = vadd.f32 %v759, %v959
    %v968 = vadd.f32 %v760, %v960
    %v969 = vld [vmem:[%s2 + $0x1c0] sm:$0xff]
    %v970 = vld [vmem:[%s2 + $0x1c8] sm:$0xff]
    %v971 = vld [vmem:[%s2 + $0x1d0] sm:$0xff]
    %v972 = vld [vmem:[%s2 + $0x1d8] sm:$0xff]
    %973 = vset.pattern.permute.xlu0 14
    %974 = vperm.xlu0 %973, %v257
    %v975 = vpop.permute.xlu0 %974
    %977 = vset.pattern.permute.xlu0 14
    %978 = vperm.xlu0 %977, %v258
    %v979 = vpop.permute.xlu0 %978
    %981 = vset.pattern.permute.xlu0 14
    %982 = vperm.xlu0 %981, %v259
    %v983 = vpop.permute.xlu0 %982
    %985 = vset.pattern.permute.xlu0 14
    %986 = vperm.xlu0 %985, %v260
    %v987 = vpop.permute.xlu0 %986
    %989 = vset.pattern.permute.xlu0 14
    %990 = vperm.xlu0 %989, %v261
    %v991 = vpop.permute.xlu0 %990
    %993 = vset.pattern.permute.xlu0 14
    %994 = vperm.xlu0 %993, %v262
    %v995 = vpop.permute.xlu0 %994
    %997 = vset.pattern.permute.xlu0 14
    %998 = vperm.xlu0 %997, %v263
    %v999 = vpop.permute.xlu0 %998
    %1001 = vset.pattern.permute.xlu0 14
    %1002 = vperm.xlu0 %1001, %v264
    %v1003 = vpop.permute.xlu0 %1002
    %v1005 = vmul.f32 %v975, %v969
    %v1006 = vmul.f32 %v979, %v970
    %v1007 = vmul.f32 %v983, %v971
    %v1008 = vmul.f32 %v987, %v972
    %v1009 = vmul.f32 %v991, %v969
    %v1010 = vmul.f32 %v995, %v970
    %v1011 = vmul.f32 %v999, %v971
    %v1012 = vmul.f32 %v1003, %v972
    %v1013 = vadd.f32 %v805, %v1005
    %v1014 = vadd.f32 %v806, %v1006
    %v1015 = vadd.f32 %v807, %v1007
    %v1016 = vadd.f32 %v808, %v1008
    %v1017 = vadd.f32 %v809, %v1009
    %v1018 = vadd.f32 %v810, %v1010
    %v1019 = vadd.f32 %v811, %v1011
    %v1020 = vadd.f32 %v812, %v1012
    %v1021 = vld [vmem:[%s2 + $0x1e0] sm:$0xff]
    %v1022 = vld [vmem:[%s2 + $0x1e8] sm:$0xff]
    %v1023 = vld [vmem:[%s2 + $0x1f0] sm:$0xff]
    %v1024 = vld [vmem:[%s2 + $0x1f8] sm:$0xff]
    %1025 = vset.pattern.permute.xlu0 15
    %1026 = vperm.xlu0 %1025, %v257
    %v1027 = vpop.permute.xlu0 %1026
    %1029 = vset.pattern.permute.xlu0 15
    %1030 = vperm.xlu0 %1029, %v258
    %v1031 = vpop.permute.xlu0 %1030
    %1033 = vset.pattern.permute.xlu0 15
    %1034 = vperm.xlu0 %1033, %v259
    %v1035 = vpop.permute.xlu0 %1034
    %1037 = vset.pattern.permute.xlu0 15
    %1038 = vperm.xlu0 %1037, %v260
    %v1039 = vpop.permute.xlu0 %1038
    %1041 = vset.pattern.permute.xlu0 15
    %1042 = vperm.xlu0 %1041, %v261
    %v1043 = vpop.permute.xlu0 %1042
    %1045 = vset.pattern.permute.xlu0 15
    %1046 = vperm.xlu0 %1045, %v262
    %v1047 = vpop.permute.xlu0 %1046
    %1049 = vset.pattern.permute.xlu0 15
    %1050 = vperm.xlu0 %1049, %v263
    %v1051 = vpop.permute.xlu0 %1050
    %1053 = vset.pattern.permute.xlu0 15
    %1054 = vperm.xlu0 %1053, %v264
    %v1055 = vpop.permute.xlu0 %1054
    %v1057 = vmul.f32 %v1027, %v1021
    %v1058 = vmul.f32 %v1031, %v1022
    %v1059 = vmul.f32 %v1035, %v1023
    %v1060 = vmul.f32 %v1039, %v1024
    %v1061 = vmul.f32 %v1043, %v1021
    %v1062 = vmul.f32 %v1047, %v1022
    %v1063 = vmul.f32 %v1051, %v1023
    %v1064 = vmul.f32 %v1055, %v1024
    %v1065 = vadd.f32 %v857, %v1057
    %v1066 = vadd.f32 %v858, %v1058
    %v1067 = vadd.f32 %v859, %v1059
    %v1068 = vadd.f32 %v860, %v1060
    %v1069 = vadd.f32 %v861, %v1061
    %v1070 = vadd.f32 %v862, %v1062
    %v1071 = vadd.f32 %v863, %v1063
    %v1072 = vadd.f32 %v864, %v1064
    %v1073 = vadd.f32 %v909, %v961
    %v1074 = vadd.f32 %v910, %v962
    %v1075 = vadd.f32 %v911, %v963
    %v1076 = vadd.f32 %v912, %v964
    %v1077 = vadd.f32 %v913, %v965
    %v1078 = vadd.f32 %v914, %v966
    %v1079 = vadd.f32 %v915, %v967
    %v1080 = vadd.f32 %v916, %v968
    %v1081 = vadd.f32 %v1013, %v1065
    %v1082 = vadd.f32 %v1014, %v1066
    %v1083 = vadd.f32 %v1015, %v1067
    %v1084 = vadd.f32 %v1016, %v1068
    %v1085 = vadd.f32 %v1017, %v1069
    %v1086 = vadd.f32 %v1018, %v1070
    %v1087 = vadd.f32 %v1019, %v1071
    %v1088 = vadd.f32 %v1020, %v1072
    %v1089 = vadd.f32 %v1073, %v1081
    %v1090 = vadd.f32 %v1074, %v1082
    %v1091 = vadd.f32 %v1075, %v1083
    %v1092 = vadd.f32 %v1076, %v1084
    %v1093 = vadd.f32 %v1077, %v1085
    %v1094 = vadd.f32 %v1078, %v1086
    %v1095 = vadd.f32 %v1079, %v1087
    %v1096 = vadd.f32 %v1080, %v1088
    %vm1097 = vcmask 523264
    %v1098 = vsel %vm1097, %v1089, 0.0
    %v1099 = vsel %vm1097, %v1090, 0.0
    %v1100 = vadd.f32 %v1098, %v1099
    %v1101 = vsel %vm1097, %v1091, 0.0
    %v1102 = vadd.f32 %v1100, %v1101
    %v1103 = vsel %vm1097, %v1092, 0.0
    %v1104 = vadd.f32 %v1102, %v1103
    %v1105 = vrot.slane %v1104, 4
    %v1106 = vadd.f32 %v1104, %v1105
    %v1107 = vrot.slane %v1106, 2
    %v1108 = vadd.f32 %v1106, %v1107
    %v1109 = vrot.slane %v1108, 1
    %v1110 = vadd.f32 %v1108, %v1109
    %v1111 = vsel %vm1097, %v1093, 0.0
    %v1112 = vsel %vm1097, %v1094, 0.0
    %v1113 = vadd.f32 %v1111, %v1112
    %v1114 = vsel %vm1097, %v1095, 0.0
    %v1115 = vadd.f32 %v1113, %v1114
    %v1116 = vsel %vm1097, %v1096, 0.0
    %v1117 = vadd.f32 %v1115, %v1116
    %v1118 = vrot.slane %v1117, 4
    %v1119 = vadd.f32 %v1117, %v1118
    %v1120 = vrot.slane %v1119, 2
    %v1121 = vadd.f32 %v1119, %v1120
    %v1122 = vrot.slane %v1121, 1
    %v1123 = vadd.f32 %v1121, %v1122
    %v1124 = vld [vmem:[%s2 + $0x240] sm:$0x1]
    %v1125 = vlaneseq
    %v1126 = vshrl.u32 %v1125, 7
    %v1127 = vsub.s32 0, %v1126
    %v1128 = vrot.slane %v1124, %v1127
    %v1129 = vadd.f32 %v1110, %v1128
    %v1130 = vadd.f32 %v1123, %v1128
    %v1131 = vmax.f32 %v1129, 0.0
    %v1132 = vmax.f32 %v1130, 0.0
    %v1133 = vld [vmem:[%s2 + $0x200] sm:$0xff]
    %v1134 = vld [vmem:[%s2 + $0x208] sm:$0xff]
    %v1135 = vld [vmem:[%s2 + $0x210] sm:$0xff]
    %v1136 = vld [vmem:[%s2 + $0x218] sm:$0xff]
    %v1137 = vld [vmem:[%s2 + $0x220] sm:$0xff]
    %v1138 = vld [vmem:[%s2 + $0x228] sm:$0xff]
    %v1139 = vld [vmem:[%s2 + $0x230] sm:$0xff]
    %v1140 = vld [vmem:[%s2 + $0x238] sm:$0xff]
    %v1141 = vld [vmem:[%s2 + $0x248] sm:$0x1]
    %v1142 = vlaneseq
    %v1143 = vshrl.u32 %v1142, 7
    %v1144 = vsub.s32 0, %v1143
    %v1145 = vrot.slane %v1141, %v1144
    %v1148 = vrot.slane %v1132, 7
    %vm1149 = vcmask 1041409
    %v1150 = vsel %vm1149, %v1148, %v1131
    %v1151 = vsel %vm1097, %v1150, 0
    %1153 = vmatprep.subr.mxu0 0.0
    %1154 = vmatpush1.msra.mxu0 0.0
    %1155 = vmatprep.subr.mxu0 0.0
    %1156 = vmatpush1.msra.mxu0 0.0
    %1157 = vmatprep.subr.mxu0 0.0
    %1158 = vmatpush1.msra.mxu0 0.0
    %1159 = vmatprep.subr.mxu0 0.0
    %1160 = vmatpush1.msra.mxu0 0.0
    %1161 = vmatprep.subr.mxu0 0.0
    %1162 = vmatpush1.msra.mxu0 0.0
    %1163 = vmatprep.subr.mxu0 0.0
    %1164 = vmatpush1.msra.mxu0 0.0
    %1165 = vmatprep.subr.mxu0 0.0
    %1166 = vmatpush1.msra.mxu0 0.0
    %1167 = vmatprep.subr.mxu0 0.0
    %1168 = vmatpush1.msra.mxu0 0.0
    %1169 = vmatprep.subr.mxu0 0.0
    %1170 = vmatpush1.msra.mxu0 %v1140
    %1171 = vmatprep.subr.mxu0 0.0
    %1172 = vmatpush1.msra.mxu0 %v1139
    %1173 = vmatprep.subr.mxu0 0.0
    %1174 = vmatpush1.msra.mxu0 %v1138
    %1175 = vmatprep.subr.mxu0 0.0
    %1176 = vmatpush1.msra.mxu0 %v1137
    %1177 = vmatprep.subr.mxu0 0.0
    %1178 = vmatpush1.msra.mxu0 %v1136
    %1179 = vmatprep.subr.mxu0 0.0
    %1180 = vmatpush1.msra.mxu0 %v1135
    %1181 = vmatprep.subr.mxu0 0.0
    %1182 = vmatpush1.msra.mxu0 %v1134
    %1183 = vmatprep.subr.mxu0 0.0
    %1184 = vmatpush1.msra.mxu0 %v1133
    %1185 = vmatprep.subr.mxu0 0.0
    %1186 = vmatpush2.msra.mxu0 0.0
    %1187 = vmatprep.subr.mxu0 0.0
    %1188 = vmatpush2.msra.mxu0 0.0
    %1189 = vmatprep.subr.mxu0 0.0
    %1190 = vmatpush2.msra.mxu0 0.0
    %1191 = vmatprep.subr.mxu0 0.0
    %1192 = vmatpush2.msra.mxu0 0.0
    %1193 = vmatprep.subr.mxu0 0.0
    %1194 = vmatpush2.msra.mxu0 0.0
    %1195 = vmatprep.subr.mxu0 0.0
    %1196 = vmatpush2.msra.mxu0 0.0
    %1197 = vmatprep.subr.mxu0 0.0
    %1198 = vmatpush2.msra.mxu0 0.0
    %1199 = vmatprep.subr.mxu0 0.0
    %1200 = vmatpush2.msra.mxu0 0.0
    %1201 = vmatprep.subr.mxu0 0.0
    %1202 = vmatpush2.msra.mxu0 0.0
    %1203 = vmatprep.subr.mxu0 0.0
    %1204 = vmatpush2.msra.mxu0 0.0
    %1205 = vmatprep.subr.mxu0 0.0
    %1206 = vmatpush2.msra.mxu0 0.0
    %1207 = vmatprep.subr.mxu0 0.0
    %1208 = vmatpush2.msra.mxu0 0.0
    %1209 = vmatprep.subr.mxu0 0.0
    %1210 = vmatpush2.msra.mxu0 0.0
    %1211 = vmatprep.subr.mxu0 0.0
    %1212 = vmatpush2.msra.mxu0 0.0
    %1213 = vmatprep.subr.mxu0 0.0
    %1214 = vmatpush2.msra.mxu0 0.0
    %1215 = vmatprep.subr.mxu0 0.0
    %1216 = vmatpush2.msra.mxu0 0.0
    %1217 = vmatprep.mubr.f32.mxu0 0.0
    %1218 = vmatmul.mubr.f32.gmra.mxu0 %v1151
    %v1219 = vpop.f32.mrf.mxu0
    %v1220 = vadd.f32 %v1145, %v1219
    %v1221 = vpop.f32.mrf.mxu0
    %1222 = vdwg.mxu0
    %vm1223 = vcmask 41984
    %v1224 = vsel %vm1223, %v1220, -inf
    %1225 = vmax.xlane.f32.xlu0 %v1224
    %v1226 = vpop.xlane.xlu0 %1225
    %v1227 = vsub.f32 %v1220, %v1226
    %v1228 = vmul.f32 %v1227, 1.442695
    %v1229 = vpow.pop %v1228
    %v1230 = vsel %vm1223, %v1229, 0.0
    %1231 = vadd.xlane.f32.xlu0 %v1230
    %v1232 = vpop.xlane.xlu0 %1231
    %v1233 = vrcp.pop %v1232
    %v1234 = vmul.f32 %v1229, %v1233
    %1235 = vst.msk [vmem:[#allocation2] sm:$0x3] %vm1223, %v1234
    // Predicated region
    $region14: #{mynet_forward.1} parent=1 // pred_check
      _
    $region15: #{mynet_forward.1} parent=1 // pred_check_branch
      %1237 = sbr.rel (0) target = $region17
    $region16: #{mynet_forward.1} parent=1 // pred_region
      %s1239 = ssub.s32 32, 32
      %1240 = vsyncadd [#allocation3], %s1239
      %s1242 = sshll.u32 [#allocation2], 4
      %s1243 = int_to_ptr.vmem [resolvable:$true] %s1242
      %1245 = dma.vmem_to_hbm [thread:$0]  %s1243, 32, %s3, [#allocation3]
    $region17: #{mynet_forward.1} parent=1 // pred_fallthru
      _
    // Predicated region
    $region18: #{mynet_forward.1} parent=1 // pred_check
      _
    $region19: #{mynet_forward.1} parent=1 // pred_check_branch
      %1247 = sbr.rel (0) target = $region21
    $region20: #{mynet_forward.1} parent=1 // pred_region
      %1248 = dma.done [#allocation3], 32
    $region21: #{mynet_forward.1} parent=1 // pred_fallthru
      _
    %1249 = vsyncpa [#allocation3], 1

</llo_original>
